<compile_context>
chip_gen: v5e
topology: v5e:2x2
jax: 0.10.0
libtpu: 0.0.40
codegen_flags: <defaults>
</compile_context>

<pallas_src>
import functools

import jax
import jax.numpy as jnp
from jax import lax
from jax.experimental import pallas as pl
from jax.experimental.pallas import tpu as pltpu


# --------------------------------------------------------------------------
# Kernel 1: one-hot MXU gather (small / moderate vocab)
# --------------------------------------------------------------------------
def _embed_matmul_kernel(tok_ref, table_ref, out_ref):
    # tok_ref:   (T, 1) int32    VMEM  -- token ids for this tile (pre-clamped)
    # table_ref: (V, D) f32/bf16 VMEM  -- full table, resident across the grid
    # out_ref:   (T, D)          VMEM  -- output tile
    tok = tok_ref[...]                                   # (T, 1)
    t_rows = tok.shape[0]
    vocab = table_ref.shape[0]
    col = lax.broadcasted_iota(jnp.int32, (t_rows, vocab), 1)
    onehot = (col == tok).astype(table_ref.dtype)        # (T, V)
    out_ref[...] = jnp.dot(
        onehot, table_ref[...], preferred_element_type=jnp.float32
    ).astype(out_ref.dtype)


# --------------------------------------------------------------------------
# Kernel 2: row gather with coalesced (8, D) stores (larger vocab in VMEM)
# --------------------------------------------------------------------------
def _embed_gather_kernel(tok_ref, table_ref, out_ref):
    # tok_ref:   (Np,)  int32    SMEM  -- all token ids, scalar-prefetched, pre-clamped
    # table_ref: (V, D) f32/bf16 VMEM  -- full table, resident across the grid
    # out_ref:   (T, D)          VMEM  -- output tile
    i = pl.program_id(0)
    t_rows, d = out_ref.shape
    base = i * t_rows

    n_groups = t_rows // 8
    rem = t_rows - n_groups * 8

    # Cap unrolling so live vregs stay bounded: 8 rows * ceil(D/128) vregs/group.
    vregs_per_group = 8 * max(1, (d + 127) // 128)
    unroll = max(1, min(4, 32 // vregs_per_group))
    if n_groups > 0:
        unroll = min(unroll, n_groups)

        def group_body(g, carry):
            r8 = pl.multiple_of(g * 8, 8)
            rows = [
                table_ref[pl.ds(tok_ref[base + r8 + r], 1), :] for r in range(8)
            ]
            out_ref[pl.ds(r8, 8), :] = jnp.concatenate(rows, axis=0)
            return carry

        lax.fori_loop(0, n_groups, group_body, 0, unroll=unroll)

    # Static tail (< 8 rows) — only when T is not a multiple of 8.
    for r in range(rem):
        t = n_groups * 8 + r
        out_ref[pl.ds(t, 1), :] = table_ref[pl.ds(tok_ref[base + t], 1), :]


# --------------------------------------------------------------------------
# Wrapper
# --------------------------------------------------------------------------
def _pick_token_tile(n, max_tile):
    """Pick (T, Np): a tile T (mult of 8, or == full axis) with T | Np, Np >= n."""
    if n <= max_tile:
        return n, n                      # single step; block == full dim is legal
    t = max_tile
    while t > 8 and n % t != 0:
        t //= 2
    if n % t == 0:
        return t, n                      # divides exactly: no pad, no post-slice
    # Rare fallback: pad the token axis minimally to a multiple of 8.
    np_ = ((n + 7) // 8) * 8
    t = max_tile
    while t > 8 and np_ % t != 0:
        t //= 2
    return t, np_


@functools.partial(jax.jit, static_argnames=("token_tile", "matmul_vocab_limit"))
def vanilla_embedder(tokens, embedding_table, *, token_tile=1024,
                     matmul_vocab_limit=2048):
    """Pallas equivalent of VanillaEmbedder.forward({'tokens': tokens}).

    tokens:          int   [B, S]
    embedding_table: float [V, D]   (f32 or bf16; output keeps this dtype)
    returns:         [B, S, D] in embedding_table.dtype
    """
    assert tokens.ndim == 2, "tokens passed to vanilla embedder must be 2 dimensions"
    B, S = tokens.shape
    V, D = embedding_table.shape
    N = B * S
    out_dtype = embedding_table.dtype

    # Clamp once in the wrapper (fused vector op) instead of per-row in-kernel.
    tok_flat = jnp.clip(tokens.reshape(N).astype(jnp.int32), 0, V - 1)

    T, Np = _pick_token_tile(N, token_tile)
    if Np != N:
        tok_flat = jnp.pad(tok_flat, (0, Np - N))   # pad ids = 0 (valid row)
    grid = (Np // T,)

    table = embedding_table                          # keep native dtype
    itemsize_tbl = jnp.dtype(table.dtype).itemsize
    itemsize_out = jnp.dtype(out_dtype).itemsize

    table_bytes = V * D * itemsize_tbl
    out_tile_bytes = T * D * itemsize_out
    ids_bytes = 4 * Np
    vmem_need = 2 * table_bytes + 4 * out_tile_bytes + 4 * ids_bytes + (4 << 20)
    vmem_limit = int(min(max(vmem_need, 16 << 20), 128 << 20))

    use_matmul = V <= matmul_vocab_limit
    cost = pl.CostEstimate(
        flops=2 * Np * V * D if use_matmul else 0,
        transcendentals=0,
        bytes_accessed=int(table_bytes + Np * D * itemsize_out + ids_bytes),
    )
    cparams = pltpu.CompilerParams(
        dimension_semantics=("parallel",),
        vmem_limit_bytes=vmem_limit,
    )

    if use_matmul:
        out = pl.pallas_call(
            _embed_matmul_kernel,
            out_shape=jax.ShapeDtypeStruct((Np, D), out_dtype),
            grid_spec=pltpu.PrefetchScalarGridSpec(
                num_scalar_prefetch=0,
                grid=grid,
                in_specs=[
                    pl.BlockSpec((T, 1), lambda i: (i, 0)),    # ids tile (VMEM)
                    pl.BlockSpec((V, D), lambda i: (0, 0)),    # resident table
                ],
                out_specs=pl.BlockSpec((T, D), lambda i: (i, 0)),
            ),
            compiler_params=cparams,
            cost_estimate=cost,
        )(tok_flat[:, None], table)
    else:
        # TODO(synk): switch to an HBM DMA-gather ring when V*D*itemsize exceeds
        # the VMEM budget (mandatory on v7x's 64 MiB for large vocabularies).
        out = pl.pallas_call(
            _embed_gather_kernel,
            out_shape=jax.ShapeDtypeStruct((Np, D), out_dtype),
            grid_spec=pltpu.PrefetchScalarGridSpec(
                num_scalar_prefetch=1,                         # ids land in SMEM
                grid=grid,
                in_specs=[
                    pl.BlockSpec((V, D), lambda i, tok: (0, 0)),   # resident table
                ],
                out_specs=pl.BlockSpec((T, D), lambda i, tok: (i, 0)),
            ),
            compiler_params=cparams,
            cost_estimate=cost,
        )(tok_flat, table)

    if Np != N:
        out = out[:N]
    return out.reshape(B, S, D)


if __name__ == "__main__":
    # Small deterministic setup consistent with the module:
    #   nn.Embedding(vocab_size, embedding_dim), tokens [batch, max_num_timesteps]
    vocab_size = 64
    embedding_dim = 32
    batch = 2
    seq = 8

    key = jax.random.PRNGKey(0)
    k_table, k_tok = jax.random.split(key)

    table_f32 = jax.random.normal(
        k_table, (vocab_size, embedding_dim), dtype=jnp.float32
    )
    tokens = jax.random.randint(
        k_tok, (batch, seq), minval=0, maxval=vocab_size, dtype=jnp.int32
    )
    ref = jnp.take(table_f32, tokens, axis=0)

    # Path 1: one-hot MXU gather (primary path for small vocab).
    out = jax.block_until_ready(vanilla_embedder(tokens, table_f32))
    assert out.shape == (batch, seq, embedding_dim)
    assert out.dtype == table_f32.dtype
    assert jnp.allclose(out, ref, atol=1e-6), "matmul-path mismatch vs reference"

    # Path 2: coalesced row-gather path (forced, as used for large vocabularies).
    out_g = jax.block_until_ready(
        vanilla_embedder(tokens, table_f32, matmul_vocab_limit=0)
    )
    assert jnp.allclose(out_g, ref, atol=1e-6), "gather-path mismatch vs reference"

    # bf16 table: output stays bf16 (weight dtype), values still exact row picks.
    table_bf16 = table_f32.astype(jnp.bfloat16)
    out_bf = jax.block_until_ready(vanilla_embedder(tokens, table_bf16))
    ref_bf = jnp.take(table_bf16, tokens, axis=0)
    assert out_bf.dtype == jnp.bfloat16
    assert jnp.allclose(
        out_bf.astype(jnp.float32), ref_bf.astype(jnp.float32), atol=1e-6
    ), "bf16-path mismatch vs reference"

    print("KERNEL_OK")
</pallas_src>

<mosaic_0001>
module attributes {stable_mosaic.version = 11 : i64} {
  func.func @_embed_matmul_kernel(%arg0: i32, %arg1: memref<16x1xi32, #tpu.memory_space<vmem>>, %arg2: memref<64x32xf32, #tpu.memory_space<vmem>>, %arg3: memref<16x32xf32, #tpu.memory_space<vmem>>) attributes {dimension_semantics = [#tpu.dimension_semantics<parallel>], iteration_bounds = array<i64: 1>, scalar_prefetch = 0 : i64, scratch_operands = 0 : i64, tpu.core_type = #tpu.core_type<tc>, window_params = [{transform_indices = @transform_0, window_bounds = array<i64: 16, 1>}, {pipeline_mode = #tpu.pipeline_mode<synchronous>, transform_indices = @transform_1, window_bounds = array<i64: 64, 32>}, {transform_indices = @transform_2, window_bounds = array<i64: 16, 32>}]} {
    %c0 = arith.constant 0 : index
    %c0_0 = arith.constant 0 : index
    %0 = vector.load %arg1[%c0, %c0_0] : memref<16x1xi32, #tpu.memory_space<vmem>>, vector<16x1xi32>
    %1 = tpu.iota {dimensions = array<i32: 1>} : vector<16x64xi32>
    %2 = vector.broadcast %0 : vector<16x1xi32> to vector<16x64xi32>
    %3 = arith.cmpi eq, %1, %2 : vector<16x64xi32>
    %4 = arith.extui %3 : vector<16x64xi1> to vector<16x64xi32>
    %5 = arith.sitofp %4 : vector<16x64xi32> to vector<16x64xf32>
    %c0_1 = arith.constant 0 : index
    %c0_2 = arith.constant 0 : index
    %6 = vector.load %arg2[%c0_1, %c0_2] : memref<64x32xf32, #tpu.memory_space<vmem>>, vector<64x32xf32>
    %cst = arith.constant dense<0.000000e+00> : vector<16x32xf32>
    %7 = tpu.matmul %5, %6, %cst {dimension_numbers = #tpu.dot_dimension_numbers<[1], [0], [0], [1], [0, 0, 1, 1], [], []>} : vector<16x64xf32>, vector<64x32xf32>, vector<16x32xf32> -> vector<16x32xf32>
    %c0_3 = arith.constant 0 : index
    %c0_4 = arith.constant 0 : index
    %8 = vector.load %arg3[%c0_3, %c0_4] : memref<16x32xf32, #tpu.memory_space<vmem>>, vector<16x32xf32>
    tpu.vector_store %arg3[%c0_3, %c0_4], %7 {strides = array<i32>} : memref<16x32xf32, #tpu.memory_space<vmem>>, vector<16x32xf32>,
    return
  }
  func.func @transform_0(%arg0: i32) -> (i32, i32) {
    %c0_i32 = arith.constant 0 : i32
    %c0_i32_0 = arith.constant 0 : i32
    return %arg0, %c0_i32 : i32, i32
  }
  func.func @transform_1(%arg0: i32) -> (i32, i32) {
    %c0_i32 = arith.constant 0 : i32
    %c0_i32_0 = arith.constant 0 : i32
    %c0_i32_1 = arith.constant 0 : i32
    return %c0_i32, %c0_i32_0 : i32, i32
  }
  func.func @transform_2(%arg0: i32) -> (i32, i32) {
    %c0_i32 = arith.constant 0 : i32
    %c0_i32_0 = arith.constant 0 : i32
    return %arg0, %c0_i32 : i32, i32
  }
}

</mosaic_0001>

<llo_original>
// kernel: vanilla_embedder.1
$region0: #{vanilla_embedder.1}
  #allocation0 [shape = 'u32[]', space=smem, size = 0x4, offset = 0x4, fixed_abs, tag = 'smem constant byte address 0x4 - core index']
  #allocation1 [shape = 'u32[72,128]{1,0:T(1,128)}', space=vmem, size = 0x9000, scoped, tag = 'internal scratch']
  %s0 = inlined_call_operand.vmem [shape: s32[16,1], index: 0, kind: input, shape index: {}]
  %s1 = inlined_call_operand.vmem [shape: f32[64,32], index: 1, kind: input, shape index: {}]
  %s2 = inlined_call_operand.hbm [shape: f32[16,32], index: 2, kind: output, shape index: {}]
  %s3 = sld [smem:[#allocation0]]
  $region18: #{vanilla_embedder.1} parent=0
    _
  %s5 = ssub.s32 1, %s3
  %s6 = scalar_select 0, %s5, %s3
  $region1: #{vanilla_embedder.1} parent=0
    #allocation2 [shape = 'u8[8192]{0}', space=vmem, size = 0x2000, scoped, tag = 'output window, operand 0, single buffered']
    #allocation3 [shape = 's32[1]{0}', space=sflag, size = 0x4, scoped, tag = 'scoped memory for vanilla_embedder.1']
    %7 = vsyncpa [#allocation3], 0
    // Predicated region
    $region2: #{vanilla_embedder.1} parent=1 // pred_check
      _
    $region3: #{vanilla_embedder.1} parent=1 // pred_check_branch
      %9 = sbr.rel (0) target = $region5
    $region4: #{vanilla_embedder.1} parent=1 // pred_region
      _
    $region5: #{vanilla_embedder.1} parent=1 // pred_fallthru
      _
    // Predicated region
    $region6: #{vanilla_embedder.1} parent=1 // pred_check
      _
    $region7: #{vanilla_embedder.1} parent=1 // pred_check_branch
      %11 = sbr.rel (0) target = $region9
    $region8: #{vanilla_embedder.1} parent=1 // pred_region
      _
    $region9: #{vanilla_embedder.1} parent=1 // pred_fallthru
      _
    %v12 = vld [vmem:[%s0] sm:$0xff]
    %v13 = vld [vmem:[%s0 + $0x8] sm:$0xff]
    %v14 = vlaneseq
    %v15 = vand.u32 %v14, 127
    %16 = vset.pattern.permute.xlu0 0
    %17 = vperm.xlu0 %16, %v12
    %v18 = vpop.permute.xlu0 %17
    %19 = vset.pattern.permute.xlu0 0
    %20 = vperm.xlu0 %19, %v13
    %v21 = vpop.permute.xlu0 %20
    %vm22 = vcmp.eq.s32.totalorder %v15, %v18
    %vm23 = vcmp.eq.s32.totalorder %v15, %v21
    %v24 = vsel %vm22, 1, 0
    %v25 = vsel %vm23, 1, 0
    %v26 = vcvt.s32.f32 %v24
    %v27 = vcvt.s32.f32 %v25
    %v28 = vld [vmem:[%s1] sm:$0xff]
    %v29 = vld [vmem:[%s1 + $0x8] sm:$0xff]
    %v30 = vld [vmem:[%s1 + $0x10] sm:$0xff]
    %v31 = vld [vmem:[%s1 + $0x18] sm:$0xff]
    %v32 = vld [vmem:[%s1 + $0x20] sm:$0xff]
    %v33 = vld [vmem:[%s1 + $0x28] sm:$0xff]
    %v34 = vld [vmem:[%s1 + $0x30] sm:$0xff]
    %v35 = vld [vmem:[%s1 + $0x38] sm:$0xff]
    %vm36 = vcmask 523264
    %v38 = vsel %vm36, %v26, 0
    %v41 = vsel %vm36, %v27, 0
    %43 = vmatpush.msra.mxu0 0.0
    %44 = vmatpush.msra.mxu0 0.0
    %45 = vmatpush.msra.mxu0 0.0
    %46 = vmatpush.msra.mxu0 0.0
    %47 = vmatpush.msra.mxu0 0.0
    %48 = vmatpush.msra.mxu0 0.0
    %49 = vmatpush.msra.mxu0 0.0
    %50 = vmatpush.msra.mxu0 0.0
    %51 = vmatpush.msra.mxu0 %v35
    %52 = vmatpush.msra.mxu0 %v34
    %53 = vmatpush.msra.mxu0 %v33
    %54 = vmatpush.msra.mxu0 %v32
    %55 = vmatpush.msra.mxu0 %v31
    %56 = vmatpush.msra.mxu0 %v30
    %57 = vmatpush.msra.mxu0 %v29
    %58 = vmatpush.msra.mxu0 %v28
    %59 = vmatmul.f32.gmra.mxu0 %v38
    %v60 = vpop.f32.mrf.mxu0
    %v61 = vadd.f32 0.0, %v60
    %62 = vmatmul.f32.gmra.mxu0 %v41
    %v63 = vpop.f32.mrf.mxu0
    %v64 = vadd.f32 0.0, %v63
    %65 = vdwg.mxu0
    %vm66 = vcmask 261120
    %67 = vst.msk [vmem:[#allocation2] sm:$0xff] %vm66, %v61
    %68 = vst.msk [vmem:[#allocation2 + $0x8] sm:$0xff] %vm66, %v64
    // Predicated region
    $region10: #{vanilla_embedder.1} parent=1 // pred_check
      _
    $region11: #{vanilla_embedder.1} parent=1 // pred_check_branch
      %70 = sbr.rel (0) target = $region13
    $region12: #{vanilla_embedder.1} parent=1 // pred_region
      %72 = vsyncadd [#allocation3], 0
      %s73 = sshll.u32 [#allocation2], 4
      %s74 = int_to_ptr.vmem [resolvable:$true] %s73
      %s75 = sshll.u32 %s2, 4
      %s76 = int_to_ptr.hbm [resolvable:$true] %s75
      %81 = dma.vmem_to_hbm [thread:$0]  %s74, 256, %s76, [#allocation3], 128, 128, 8
    $region13: #{vanilla_embedder.1} parent=1 // pred_fallthru
      _
    // Predicated region
    $region14: #{vanilla_embedder.1} parent=1 // pred_check
      _
    $region15: #{vanilla_embedder.1} parent=1 // pred_check_branch
      %83 = sbr.rel (0) target = $region17
    $region16: #{vanilla_embedder.1} parent=1 // pred_region
      %85 = dma.done [#allocation3], 256
    $region17: #{vanilla_embedder.1} parent=1 // pred_fallthru
      _
    %86 = vsyncpa [#allocation3], 1

</llo_original>
